<compile_context>
chip_gen: v7x
topology: tpu7x:2x2x1
jax: 0.10.0
libtpu: 0.0.40
codegen_flags: <defaults>
</compile_context>

<pallas_src>
import functools

import jax
import jax.numpy as jnp
from jax import lax
from jax.experimental import pallas as pl
from jax.experimental.pallas import tpu as pltpu

BN_EPS = 1e-5


def _round_up(x, m):
    return ((x + m - 1) // m) * m


# ----------------------------------------------------------------------------
# Pallas kernel A: per-point features for all scales
#   P = [features | xyz] @ W_all + b_all     (Conv1d+BN of mlps_in folded with
#                                             the xyz part of mlps_pos)
# bf16 operands, f32 accumulation, bf16 output.
# ----------------------------------------------------------------------------
def _point_mlp_kernel(x_ref, w_ref, b_ref, o_ref):
    acc = jnp.dot(x_ref[...], w_ref[...], preferred_element_type=jnp.float32)
    o_ref[...] = (acc + b_ref[...]).astype(o_ref.dtype)


def point_mlp_forward(x_aug, w_all, b_all, *, tile_n=2048,
                      out_dtype=jnp.bfloat16):
    n, c_x = x_aug.shape
    c_all = w_all.shape[1]
    tile_n = min(tile_n, _round_up(n, 8))
    n_pad = _round_up(n, tile_n)
    if n_pad != n:
        x_aug = jnp.pad(x_aug, ((0, n_pad - n), (0, 0)))
    return pl.pallas_call(
        _point_mlp_kernel,
        out_shape=jax.ShapeDtypeStruct((n_pad, c_all), out_dtype),
        grid=(n_pad // tile_n,),
        in_specs=[
            pl.BlockSpec((tile_n, c_x), lambda i: (i, 0)),
            pl.BlockSpec((c_x, c_all), lambda i: (0, 0)),
            pl.BlockSpec((1, c_all), lambda i: (0, 0)),
        ],
        out_specs=pl.BlockSpec((tile_n, c_all), lambda i: (i, 0)),
        compiler_params=pltpu.CompilerParams(
            dimension_semantics=("parallel",)),
    )(x_aug, w_all, b_all.reshape(1, c_all))


# ----------------------------------------------------------------------------
# Pallas kernel B (fused): pool over nsample (roll-tree), subtract query term,
# ReLU, mlps_out (1x1 conv + BN folded) + ReLU, empty-ball override.
# Output is transposed (c_out, M) so stores are lane-dense.
# ----------------------------------------------------------------------------
def _pool_over_samples(v, nsample, c_mid, combine):
    """Reduce (tile, nsample*c_mid) over the nsample lane-slices -> (tile, c_mid)."""
    if nsample == 1:
        return v[:, :c_mid]
    width = nsample * c_mid
    if (nsample & (nsample - 1)) == 0 and width % 128 == 0:
        # log2(nsample) full-lane-density combines; rotates run on the XLU slot.
        # With consistent-direction circular rolls the first c_mid lanes end up
        # holding the reduction over all nsample slices.
        step = nsample // 2
        while step >= 1:
            v = combine(v, pltpu.roll(v, shift=step * c_mid, axis=1))
            step //= 2
        return v[:, :c_mid]
    # Fallback for non power-of-two nsample / very narrow slabs.
    out = v[:, :c_mid]
    for s in range(1, nsample):
        out = combine(out, v[:, s * c_mid:(s + 1) * c_mid])
    return out


def _fused_group_kernel(g_ref, q_ref, wt_ref, b_ref, empty_ref, const_ref,
                        o_ref, *, nsample, c_mid, pool_method):
    g = g_ref[...]                                         # (TM, ns*c_mid) bf16
    if pool_method == 'max_pool':
        # max_s relu(g_s - q) == relu((max_s g_s) - q): pool the raw bf16 slab
        # first (exact), then subtract the query term once on c_mid lanes (f32).
        pooled_g = _pool_over_samples(g, nsample, c_mid, jnp.maximum)
        pooled = jnp.maximum(pooled_g.astype(jnp.float32) - q_ref[...], 0.0)
    else:                                                  # 'avg_pool'
        q_t = jnp.tile(q_ref[...], (1, nsample))           # (TM, ns*c_mid) f32
        v = jnp.maximum(g.astype(jnp.float32) - q_t, 0.0)
        pooled = _pool_over_samples(v, nsample, c_mid, lambda a, b: a + b)
        pooled = pooled * (1.0 / nsample)

    # mlps_out: out_t[c, m] = sum_k wt[c, k] * pooled[m, k]  (lane-dense output)
    out_t = lax.dot_general(
        wt_ref[...], pooled.astype(jnp.bfloat16),
        dimension_numbers=(((1,), (1,)), ((), ())),
        preferred_element_type=jnp.float32)
    out_t = jnp.maximum(out_t + b_ref[...], 0.0)           # mlps_out ReLU
    # Empty-ball override folded in (reference zeroes grouped features AFTER
    # mlps_in and rel_xyz BEFORE mlps_pos, so const = relu(relu(b_pos)@Wout+b_out)).
    o_ref[...] = jnp.where(empty_ref[...] != 0, const_ref[...], out_t)


def fused_group_forward(gathered, q, w_out_t, b_out_col, empty_row,
                        empty_const_col, *, nsample, c_mid,
                        pool_method='max_pool', tile_m=1024):
    m_pad, width = gathered.shape
    assert width == nsample * c_mid
    assert m_pad % tile_m == 0
    c_out = w_out_t.shape[0]
    kern = functools.partial(_fused_group_kernel, nsample=nsample,
                             c_mid=c_mid, pool_method=pool_method)
    return pl.pallas_call(
        kern,
        out_shape=jax.ShapeDtypeStruct((c_out, m_pad), jnp.float32),
        grid=(m_pad // tile_m,),
        in_specs=[
            pl.BlockSpec((tile_m, width), lambda i: (i, 0)),
            pl.BlockSpec((tile_m, c_mid), lambda i: (i, 0)),
            pl.BlockSpec((c_out, c_mid), lambda i: (0, 0)),
            pl.BlockSpec((c_out, 1), lambda i: (0, 0)),
            pl.BlockSpec((1, tile_m), lambda i: (0, i)),
            pl.BlockSpec((c_out, 1), lambda i: (0, 0)),
        ],
        out_specs=pl.BlockSpec((c_out, tile_m), lambda i: (0, i)),
        compiler_params=pltpu.CompilerParams(
            dimension_semantics=("parallel",)),
    )(gathered, q, w_out_t, b_out_col, empty_row, empty_const_col)


# ----------------------------------------------------------------------------
# VoxelQueryAndGrouping neighbor selection (plain-JAX glue; data-dependent).
# Returns selected point indices (M, nsample) and the empty-ball mask (M,).
# TODO(synk): CUDA voxel-hash query has no clean Pallas/TPU equivalent; the
#             candidate iteration order may differ from the CUDA kernel's.
# ----------------------------------------------------------------------------
def voxel_query_neighbors(new_coords_bzyx, xyz, new_xyz, voxel2point,
                          query_range, radius, nsample):
    B, Z, Y, X = voxel2point.shape
    rz, ry, rx = query_range
    dz, dy, dx = jnp.meshgrid(jnp.arange(-rz, rz + 1),
                              jnp.arange(-ry, ry + 1),
                              jnp.arange(-rx, rx + 1), indexing='ij')
    offs = jnp.stack([dz.ravel(), dy.ravel(), dx.ravel()], axis=1)   # (K, 3)

    b = new_coords_bzyx[:, 0]
    cz, cy, cx = (new_coords_bzyx[:, 1], new_coords_bzyx[:, 2],
                  new_coords_bzyx[:, 3])
    zz = cz[:, None] + offs[None, :, 0]
    yy = cy[:, None] + offs[None, :, 1]
    xx = cx[:, None] + offs[None, :, 2]
    inb = ((zz >= 0) & (zz < Z) & (yy >= 0) & (yy < Y)
           & (xx >= 0) & (xx < X))
    cand = voxel2point[b[:, None],
                       jnp.clip(zz, 0, Z - 1),
                       jnp.clip(yy, 0, Y - 1),
                       jnp.clip(xx, 0, X - 1)]                       # (M, K)
    cand = jnp.where(inb, cand, -1)
    cand_xyz = xyz[jnp.clip(cand, 0, xyz.shape[0] - 1)]              # (M, K, 3)
    d2 = jnp.sum((cand_xyz - new_xyz[:, None, :]) ** 2, axis=-1)
    ok = (cand >= 0) & (d2 <= radius * radius)

    # first `nsample` valid candidates via cumsum (no argsort); pad slots
    # beyond the valid count with the first valid candidate.
    cnt = jnp.cumsum(ok.astype(jnp.int32), axis=1)                   # (M, K)
    n_valid = cnt[:, -1]
    first_k = jnp.argmax(ok, axis=1).astype(jnp.int32)
    sels = []
    for j in range(nsample):
        sel_j = jnp.argmax(cnt >= (j + 1), axis=1).astype(jnp.int32)
        sels.append(jnp.where(n_valid > j, sel_j, first_k))
    sel = jnp.stack(sels, axis=1)                                    # (M, ns)
    idx = jnp.take_along_axis(cand, sel, axis=1)
    empty = n_valid == 0
    idx = jnp.where(empty[:, None], 0, idx)                          # safe gather target
    return idx, empty


# ----------------------------------------------------------------------------
# Module
# ----------------------------------------------------------------------------
class NeighborVoxelSAModuleMSG:
    def __init__(self, *, query_ranges, radii, nsamples, mlps,
                 use_xyz=True, pool_method='max_pool', key=None,
                 tile_n=2048, tile_m=1024):
        assert len(query_ranges) == len(nsamples) == len(mlps) == len(radii)
        assert pool_method in ('max_pool', 'avg_pool')
        self.query_ranges = query_ranges
        self.radii = radii
        self.nsamples = nsamples
        self.pool_method = pool_method
        self.use_xyz = use_xyz          # unused in forward (matches reference)
        self.tile_n = tile_n
        self.tile_m = tile_m

        if key is None:
            key = jax.random.PRNGKey(0)

        def bn_fold(c):
            # eval-mode BN with init_weights(): gamma=1, beta=0, mean=0, var=1
            gamma = jnp.ones((c,), jnp.float32)
            beta = jnp.zeros((c,), jnp.float32)
            mean = jnp.zeros((c,), jnp.float32)
            var = jnp.ones((c,), jnp.float32)
            scale = gamma / jnp.sqrt(var + BN_EPS)
            bias = beta - mean * scale
            return scale, bias

        c_in0 = mlps[0][0]
        w_blocks, b_blocks = [], []
        self.scales = []
        for spec in mlps:
            c_in, c_mid, c_out = spec
            assert c_in == c_in0, "all scales share the input feature width"
            key, k1, k2, k3 = jax.random.split(key, 4)
            # kaiming_normal (fan_in, gain sqrt(2)) on the 1x1 conv weights
            w_in = jax.random.normal(k1, (c_in, c_mid), jnp.float32) \
                * jnp.sqrt(2.0 / c_in)
            w_pos = jax.random.normal(k2, (3, c_mid), jnp.float32) \
                * jnp.sqrt(2.0 / 3.0)
            w_out = jax.random.normal(k3, (c_mid, c_out), jnp.float32) \
                * jnp.sqrt(2.0 / c_mid)
            s_in, b_in = bn_fold(c_mid)
            s_pos, b_pos = bn_fold(c_mid)
            s_out, b_out = bn_fold(c_out)
            w_in_eff = w_in * s_in[None, :]
            w_pos_eff = w_pos * s_pos[None, :]
            w_out_eff = w_out * s_out[None, :]

            # kernel-A block: rows ordered as [features | xyz]
            w_blocks.append(jnp.concatenate([w_in_eff, w_pos_eff], axis=0))
            b_blocks.append(b_in)

            # Exact output for empty query balls.  Reference zeroes grouped
            # features AFTER mlps_in (so b_in is zeroed with them) and zeroes
            # rel_xyz BEFORE mlps_pos (so b_pos survives):
            #   relu(relu(0 + b_pos) @ w_out_eff + b_out)
            empty_const = jnp.maximum(
                jnp.maximum(b_pos, 0.0) @ w_out_eff + b_out, 0.0)    # (c_out,)

            self.scales.append(dict(
                c_mid=c_mid, c_out=c_out,
                w_pos_eff=w_pos_eff, b_pos=b_pos,
                w_out_t=jnp.transpose(w_out_eff).astype(jnp.bfloat16),  # (c_out, c_mid)
                b_out_col=b_out.reshape(c_out, 1),
                empty_const_col=empty_const.reshape(c_out, 1),
            ))

        # bf16 weights feed the MXU natively; bias stays f32 (added to f32 acc).
        self.w_all = jnp.concatenate(w_blocks, axis=1).astype(jnp.bfloat16)
        self.b_all = jnp.concatenate(b_blocks, axis=0)   # (sum c_mid,) f32

    def __call__(self, xyz, xyz_batch_cnt, new_xyz, new_xyz_batch_cnt,
                 new_coords, features, voxel2point_indices):
        # mirror: new_coords[:, [0, 3, 2, 1]]  ([b, x, y, z] -> [b, z, y, x])
        new_coords = new_coords[:, jnp.array([0, 3, 2, 1])]
        M = new_xyz.shape[0]

        # Kernel A: per-point features P for all scales (features read once),
        # bf16 in / bf16 out, f32 accumulation.
        x_aug = jnp.concatenate([features, xyz], axis=1).astype(jnp.bfloat16)
        point_feats = point_mlp_forward(
            x_aug, self.w_all, self.b_all, tile_n=self.tile_n)   # (N_pad, ΣCmid) bf16

        tile_m = min(self.tile_m, _round_up(M, 128))
        m_pad = _round_up(M, tile_m)

        outs_t = []
        off = 0
        for k, sc in enumerate(self.scales):
            c_mid = sc['c_mid']
            nsample = self.nsamples[k]

            idx, empty = voxel_query_neighbors(
                new_coords, xyz, new_xyz, voxel2point_indices,
                self.query_ranges[k], self.radii[k], nsample)

            # query-side position term (tiny: M x 3 @ 3 x Cmid; plain JAX, f32)
            q = new_xyz @ sc['w_pos_eff'] - sc['b_pos'][None, :]  # (M, Cmid)
            empty_i = empty.astype(jnp.int32)

            # pad the query dimension *before* the gather so the big gathered
            # tensor is created already tile-aligned (no large pad copy).
            if m_pad != M:
                idx = jnp.pad(idx, ((0, m_pad - M), (0, 0)))
                q = jnp.pad(q, ((0, m_pad - M), (0, 0)))
                empty_i = jnp.pad(empty_i, (0, m_pad - M))

            # XLA row gather of bf16 per-point features; free reshape to a
            # lane-dense (m_pad, nsample*Cmid) slab for the Pallas kernel.
            p_k = lax.slice_in_dim(point_feats, off, off + c_mid, axis=1)
            gathered = p_k[idx].reshape(m_pad, nsample * c_mid)

            out_t = fused_group_forward(
                gathered, q.astype(jnp.float32),
                sc['w_out_t'], sc['b_out_col'],
                empty_i.reshape(1, m_pad), sc['empty_const_col'],
                nsample=nsample, c_mid=c_mid,
                pool_method=self.pool_method, tile_m=tile_m)      # (c_out, m_pad)

            outs_t.append(out_t[:, :M])
            off += c_mid

        # (Σc_out, M) -> (M, Σc_out): single small transpose at the end.
        return jnp.transpose(jnp.concatenate(outs_t, axis=0))


# ----------------------------------------------------------------------------
# Example / smoke test
# ----------------------------------------------------------------------------
if __name__ == "__main__":
    key = jax.random.PRNGKey(0)

    B = 2
    n_per = 64
    N = B * n_per                       # N1 + N2
    Z = Y = X = 8                       # voxel grid
    C_IN = 16
    M_per = 32
    M = B * M_per                       # M1 + M2

    key, kx, kq, kf, km = jax.random.split(key, 5)

    # stacked point coordinates (voxel size = 1.0, grid covers [0, 8)^3)
    xyz = jax.random.uniform(kx, (N, 3), minval=0.0, maxval=8.0,
                             dtype=jnp.float32)
    xyz_batch_cnt = jnp.array([n_per, n_per], dtype=jnp.int32)
    point_batch = jnp.repeat(jnp.arange(B, dtype=jnp.int32), n_per)

    # voxel -> point index map  (B, Z, Y, X), -1 for empty voxels
    vox = jnp.floor(xyz).astype(jnp.int32)          # (N, 3) = (x, y, z)
    voxel2point_indices = -jnp.ones((B, Z, Y, X), dtype=jnp.int32)
    voxel2point_indices = voxel2point_indices.at[
        point_batch, vox[:, 2], vox[:, 1], vox[:, 0]
    ].set(jnp.arange(N, dtype=jnp.int32))

    # query points
    new_xyz = jax.random.uniform(kq, (M, 3), minval=0.0, maxval=8.0,
                                 dtype=jnp.float32)
    new_xyz_batch_cnt = jnp.array([M_per, M_per], dtype=jnp.int32)
    q_batch = jnp.repeat(jnp.arange(B, dtype=jnp.int32), M_per)
    qvox = jnp.floor(new_xyz).astype(jnp.int32)
    # incoming new_coords layout: [batch, x, y, z]  (module permutes it)
    new_coords = jnp.concatenate([q_batch[:, None], qvox], axis=1)

    # point features
    features = jax.random.normal(kf, (N, C_IN), dtype=jnp.float32)

    module = NeighborVoxelSAModuleMSG(
        query_ranges=[[2, 2, 2], [3, 3, 3]],
        radii=[1.5, 3.0],
        nsamples=[8, 16],
        mlps=[[C_IN, 32, 64], [C_IN, 32, 32]],
        use_xyz=True,
        pool_method='max_pool',
        key=km,
    )

    out = module(xyz, xyz_batch_cnt, new_xyz, new_xyz_batch_cnt,
                 new_coords, features, voxel2point_indices)
    out = jax.block_until_ready(out)

    assert out.shape == (M, 64 + 32), out.shape
    assert bool(jnp.all(jnp.isfinite(out)))
    print("KERNEL_OK")
</pallas_src>

<mosaic_0001>
module attributes {stable_mosaic.version = 11 : i64} {
  func.func @_point_mlp_kernel(%arg0: i32, %arg1: memref<128x19xbf16, #tpu.memory_space<vmem>>, %arg2: memref<19x64xbf16, #tpu.memory_space<vmem>>, %arg3: memref<1x64xf32, #tpu.memory_space<vmem>>, %arg4: memref<128x64xbf16, #tpu.memory_space<vmem>>) attributes {dimension_semantics = [#tpu.dimension_semantics<parallel>], iteration_bounds = array<i64: 1>, scalar_prefetch = 0 : i64, scratch_operands = 0 : i64, tpu.core_type = #tpu.core_type<tc>, window_params = [{transform_indices = @transform_0, window_bounds = array<i64: 128, 19>}, {pipeline_mode = #tpu.pipeline_mode<synchronous>, transform_indices = @transform_1, window_bounds = array<i64: 19, 64>}, {pipeline_mode = #tpu.pipeline_mode<synchronous>, transform_indices = @transform_2, window_bounds = array<i64: 1, 64>}, {transform_indices = @transform_3, window_bounds = array<i64: 128, 64>}]} {
    %c0 = arith.constant 0 : index
    %c0_0 = arith.constant 0 : index
    %0 = vector.load %arg1[%c0, %c0_0] : memref<128x19xbf16, #tpu.memory_space<vmem>>, vector<128x19xbf16>
    %c0_1 = arith.constant 0 : index
    %c0_2 = arith.constant 0 : index
    %1 = vector.load %arg2[%c0_1, %c0_2] : memref<19x64xbf16, #tpu.memory_space<vmem>>, vector<19x64xbf16>
    %cst = arith.constant dense<0.000000e+00> : vector<128x64xf32>
    %2 = tpu.matmul %0, %1, %cst {dimension_numbers = #tpu.dot_dimension_numbers<[1], [0], [0], [1], [0, 0, 1, 1], [], []>} : vector<128x19xbf16>, vector<19x64xbf16>, vector<128x64xf32> -> vector<128x64xf32>
    %c0_3 = arith.constant 0 : index
    %c0_4 = arith.constant 0 : index
    %3 = vector.load %arg3[%c0_3, %c0_4] : memref<1x64xf32, #tpu.memory_space<vmem>>, vector<1x64xf32>
    %4 = vector.broadcast %3 : vector<1x64xf32> to vector<128x64xf32>
    %5 = arith.addf %2, %4 : vector<128x64xf32>
    %6 = arith.truncf %5 : vector<128x64xf32> to vector<128x64xbf16>
    %c0_5 = arith.constant 0 : index
    %c0_6 = arith.constant 0 : index
    %7 = vector.load %arg4[%c0_5, %c0_6] : memref<128x64xbf16, #tpu.memory_space<vmem>>, vector<128x64xbf16>
    tpu.vector_store %arg4[%c0_5, %c0_6], %6 {strides = array<i32>} : memref<128x64xbf16, #tpu.memory_space<vmem>>, vector<128x64xbf16>,
    return
  }
  func.func @transform_0(%arg0: i32) -> (i32, i32) {
    %c0_i32 = arith.constant 0 : i32
    %c0_i32_0 = arith.constant 0 : i32
    return %arg0, %c0_i32 : i32, i32
  }
  func.func @transform_1(%arg0: i32) -> (i32, i32) {
    %c0_i32 = arith.constant 0 : i32
    %c0_i32_0 = arith.constant 0 : i32
    %c0_i32_1 = arith.constant 0 : i32
    return %c0_i32, %c0_i32_0 : i32, i32
  }
  func.func @transform_2(%arg0: i32) -> (i32, i32) {
    %c0_i32 = arith.constant 0 : i32
    %c0_i32_0 = arith.constant 0 : i32
    %c0_i32_1 = arith.constant 0 : i32
    return %c0_i32, %c0_i32_0 : i32, i32
  }
  func.func @transform_3(%arg0: i32) -> (i32, i32) {
    %c0_i32 = arith.constant 0 : i32
    %c0_i32_0 = arith.constant 0 : i32
    return %arg0, %c0_i32 : i32, i32
  }
}

</mosaic_0001>

<llo_original>
// kernel: tpu_custom_call.1
$region0: #{tpu_custom_call.1}
  #allocation0 [shape = 'u32[]', space=smem, size = 0x4, offset = 0x4, fixed_abs, tag = 'smem constant byte address 0x4 - core index']
  #allocation1 [shape = 'u32[144,128]{1,0:T(1,128)}', space=vmem, size = 0x12000, scoped, tag = 'internal scratch']
  %s0 = inlined_call_operand.vmem [shape: bf16[128,19], index: 0, kind: input, shape index: {}]
  %s1 = inlined_call_operand.vmem [shape: bf16[19,64], index: 1, kind: input, shape index: {}]
  %s2 = inlined_call_operand.vmem [shape: f32[1,64], index: 2, kind: input, shape index: {}]
  %s3 = inlined_call_operand.vmem [shape: bf16[128,64], index: 3, kind: output, shape index: {}]
  %s4 = sld [smem:[#allocation0]]
  $region22: #{tpu_custom_call.1} parent=0
    _
  %s6 = ssub.s32 1, %s4
  %s7 = scalar_select 0, %s6, %s4
  // Predicated region
  $region2: #{tpu_custom_call.1} parent=0 // pred_check
    _
  $region3: #{tpu_custom_call.1} parent=0 // pred_check_branch
    %9 = sbr.rel (0) target = $region5
  $region4: #{tpu_custom_call.1} parent=0 // pred_region
    _
  $region5: #{tpu_custom_call.1} parent=0 // pred_fallthru
    _
  // Predicated region
  $region6: #{tpu_custom_call.1} parent=0 // pred_check
    _
  $region7: #{tpu_custom_call.1} parent=0 // pred_check_branch
    %11 = sbr.rel (0) target = $region9
  $region8: #{tpu_custom_call.1} parent=0 // pred_region
    _
  $region9: #{tpu_custom_call.1} parent=0 // pred_fallthru
    _
  // Predicated region
  $region10: #{tpu_custom_call.1} parent=0 // pred_check
    _
  $region11: #{tpu_custom_call.1} parent=0 // pred_check_branch
    %13 = sbr.rel (0) target = $region13
  $region12: #{tpu_custom_call.1} parent=0 // pred_region
    _
  $region13: #{tpu_custom_call.1} parent=0 // pred_fallthru
    _
  %v15 = vld [vmem:[%s0] sm:$0xf]
  %v16 = vld [vmem:[%s0 + $0x4] sm:$0xf]
  %v17 = vld [vmem:[%s0 + $0x8] sm:$0xf]
  %v18 = vld [vmem:[%s0 + $0xc] sm:$0xf]
  %v19 = vld [vmem:[%s0 + $0x10] sm:$0xf]
  %v20 = vld [vmem:[%s0 + $0x14] sm:$0xf]
  %v21 = vld [vmem:[%s0 + $0x18] sm:$0xf]
  %v22 = vld [vmem:[%s0 + $0x1c] sm:$0xf]
  %v23 = vld [vmem:[%s0 + $0x20] sm:$0xf]
  %v24 = vld [vmem:[%s0 + $0x24] sm:$0xf]
  %v25 = vld [vmem:[%s0 + $0x28] sm:$0xf]
  %v26 = vld [vmem:[%s0 + $0x2c] sm:$0xf]
  %v27 = vld [vmem:[%s0 + $0x30] sm:$0xf]
  %v28 = vld [vmem:[%s0 + $0x34] sm:$0xf]
  %v29 = vld [vmem:[%s0 + $0x38] sm:$0xf]
  %v30 = vld [vmem:[%s0 + $0x3c] sm:$0xf]
  %v31 = vld [vmem:[%s1] sm:$0xf]
  %v32 = vld [vmem:[%s1 + $0x4] sm:$0xf]
  %v33 = vld [vmem:[%s1 + $0x8] sm:$0x3]
  %v34 = vld [vmem:[%s2] sm:$0x1]
  %v36 = vlaneseq
  %v37 = vshrl.u32 %v36, 7
  %v38 = vsub.s32 0, %v37
  %v39 = vrot.slane %v34, %v38
  %v57 = vunpack.c.l.b16 %v15
  %v58 = vunpack.c.l.b16 %v16
  %v59 = vunpack.c.l.b16 %v17
  %v60 = vunpack.c.l.b16 %v18
  %v61 = vunpack.c.l.b16 %v19
  %v62 = vunpack.c.l.b16 %v20
  %v63 = vunpack.c.l.b16 %v21
  %v64 = vunpack.c.l.b16 %v22
  %v65 = vunpack.c.l.b16 %v23
  %v66 = vunpack.c.l.b16 %v24
  %v67 = vunpack.c.l.b16 %v25
  %v68 = vunpack.c.l.b16 %v26
  %v69 = vunpack.c.l.b16 %v27
  %v70 = vunpack.c.l.b16 %v28
  %v71 = vunpack.c.l.b16 %v29
  %v72 = vunpack.c.l.b16 %v30
  %v73 = vpack.c.b16 %v58, %v57
  %v74 = vpack.c.b16 %v60, %v59
  %v75 = vpack.c.b16 %v62, %v61
  %v76 = vpack.c.b16 %v64, %v63
  %v77 = vpack.c.b16 %v66, %v65
  %v78 = vpack.c.b16 %v68, %v67
  %v79 = vpack.c.b16 %v70, %v69
  %v80 = vpack.c.b16 %v72, %v71
  %v84 = vunpack.c.l.b16 %v31
  %v85 = vunpack.c.l.b16 %v32
  %v86 = vunpack.c.l.b16 %v33
  %v87 = vpack.c.b16 %v85, %v84
  %v88 = vpack.c.b16 %v86, %v86
  %vm90 = vcmask 154624
  %v92 = vsel %vm90, %v73, 0
  %v95 = vsel %vm90, %v74, 0
  %v98 = vsel %vm90, %v75, 0
  %v101 = vsel %vm90, %v76, 0
  %v104 = vsel %vm90, %v77, 0
  %v107 = vsel %vm90, %v78, 0
  %v110 = vsel %vm90, %v79, 0
  %v113 = vsel %vm90, %v80, 0
  %vm115 = vcmask 1040384
  %vm116 = vcmask 1041408
  %v117 = vsel %vm115, 4294967295, 65535
  %v118 = vsel %vm116, %v117, 0
  %v120 = vand.u32 %v88, %v118
  %122 = vmatprep.subr.bf16.mxu0 0
  %123 = vmatpush1.bf16.msra.mxu0 %v87
  %124 = vmatprep.subr.bf16.mxu0 0
  %125 = vmatpush1.bf16.msra.mxu0 %v120
  %126 = vmatprep.subr.bf16.mxu0 0
  %127 = vmatpush1.bf16.msra.mxu0 0
  %128 = vmatprep.subr.bf16.mxu0 0
  %129 = vmatpush1.bf16.msra.mxu0 0
  %130 = vmatprep.subr.bf16.mxu0 0
  %131 = vmatpush1.bf16.msra.mxu0 0
  %132 = vmatprep.subr.bf16.mxu0 0
  %133 = vmatpush1.bf16.msra.mxu0 0
  %134 = vmatprep.subr.bf16.mxu0 0
  %135 = vmatpush1.bf16.msra.mxu0 0
  %136 = vmatprep.subr.bf16.mxu0 0
  %137 = vmatpush1.bf16.msra.mxu0 0
  %138 = vmatprep.subr.bf16.mxu0 0
  %139 = vmatpush1.bf16.msra.mxu0 0
  %140 = vmatprep.subr.bf16.mxu0 0
  %141 = vmatpush1.bf16.msra.mxu0 0
  %142 = vmatprep.subr.bf16.mxu0 0
  %143 = vmatpush1.bf16.msra.mxu0 0
  %144 = vmatprep.subr.bf16.mxu0 0
  %145 = vmatpush1.bf16.msra.mxu0 0
  %146 = vmatprep.subr.bf16.mxu0 0
  %147 = vmatpush1.bf16.msra.mxu0 0
  %148 = vmatprep.subr.bf16.mxu0 0
  %149 = vmatpush1.bf16.msra.mxu0 0
  %150 = vmatprep.subr.bf16.mxu0 0
  %151 = vmatpush1.bf16.msra.mxu0 0
  %152 = vmatprep.subr.bf16.mxu0 0
  %153 = vmatpush1.bf16.msra.mxu0 0
  %154 = vmatprep.mubr.bf16.mxu0 0
  %155 = vmatmul.mubr.bf16.gmra.mrb[0].mxu0 %v92
  %v156 = vpop.f32.mrb[0].mxu0
  %v157 = vadd.f32 %v39, %v156
  %v158 = vpop.f32.mrb[0].mxu0
  %v159 = vpop.f32.mrb[0].mxu0
  %v160 = vadd.f32 %v39, %v159
  %v161 = vpop.f32.mrb[0].mxu0
  %162 = vmatprep.mubr.bf16.mxu0 0
  %163 = vmatmul.mubr.bf16.gmra.mrb[0].mxu0 %v95
  %v164 = vpop.f32.mrb[0].mxu0
  %v165 = vadd.f32 %v39, %v164
  %v166 = vpop.f32.mrb[0].mxu0
  %v167 = vpop.f32.mrb[0].mxu0
  %v168 = vadd.f32 %v39, %v167
  %v169 = vpop.f32.mrb[0].mxu0
  %170 = vmatprep.mubr.bf16.mxu0 0
  %171 = vmatmul.mubr.bf16.gmra.mrb[0].mxu0 %v98
  %v172 = vpop.f32.mrb[0].mxu0
  %v173 = vadd.f32 %v39, %v172
  %v174 = vpop.f32.mrb[0].mxu0
  %v175 = vpop.f32.mrb[0].mxu0
  %v176 = vadd.f32 %v39, %v175
  %v177 = vpop.f32.mrb[0].mxu0
  %178 = vmatprep.mubr.bf16.mxu0 0
  %179 = vmatmul.mubr.bf16.gmra.mrb[0].mxu0 %v101
  %v180 = vpop.f32.mrb[0].mxu0
  %v181 = vadd.f32 %v39, %v180
  %v182 = vpop.f32.mrb[0].mxu0
  %v183 = vpop.f32.mrb[0].mxu0
  %v184 = vadd.f32 %v39, %v183
  %v185 = vpop.f32.mrb[0].mxu0
  %186 = vmatprep.mubr.bf16.mxu0 0
  %187 = vmatmul.mubr.bf16.gmra.mrb[0].mxu0 %v104
  %v188 = vpop.f32.mrb[0].mxu0
  %v189 = vadd.f32 %v39, %v188
  %v190 = vpop.f32.mrb[0].mxu0
  %v191 = vpop.f32.mrb[0].mxu0
  %v192 = vadd.f32 %v39, %v191
  %v193 = vpop.f32.mrb[0].mxu0
  %194 = vmatprep.mubr.bf16.mxu0 0
  %195 = vmatmul.mubr.bf16.gmra.mrb[0].mxu0 %v107
  %v196 = vpop.f32.mrb[0].mxu0
  %v197 = vadd.f32 %v39, %v196
  %v198 = vpop.f32.mrb[0].mxu0
  %v199 = vpop.f32.mrb[0].mxu0
  %v200 = vadd.f32 %v39, %v199
  %v201 = vpop.f32.mrb[0].mxu0
  %202 = vmatprep.mubr.bf16.mxu0 0
  %203 = vmatmul.mubr.bf16.gmra.mrb[0].mxu0 %v110
  %v204 = vpop.f32.mrb[0].mxu0
  %v205 = vadd.f32 %v39, %v204
  %v206 = vpop.f32.mrb[0].mxu0
  %v207 = vpop.f32.mrb[0].mxu0
  %v208 = vadd.f32 %v39, %v207
  %v209 = vpop.f32.mrb[0].mxu0
  %210 = vmatprep.mubr.bf16.mxu0 0
  %211 = vmatmul.mubr.bf16.gmra.mrb[0].mxu0 %v113
  %v212 = vpop.f32.mrb[0].mxu0
  %v213 = vadd.f32 %v39, %v212
  %v214 = vpop.f32.mrb[0].mxu0
  %v215 = vpop.f32.mrb[0].mxu0
  %v216 = vadd.f32 %v39, %v215
  %v217 = vpop.f32.mrb[0].mxu0
  %218 = vdwg.mxu0
  %v219 = vpack.c.bf16 %v160, %v157
  %v220 = vpack.c.bf16 %v168, %v165
  %v221 = vpack.c.bf16 %v176, %v173
  %v222 = vpack.c.bf16 %v184, %v181
  %v223 = vpack.c.bf16 %v192, %v189
  %v224 = vpack.c.bf16 %v200, %v197
  %v225 = vpack.c.bf16 %v208, %v205
  %v226 = vpack.c.bf16 %v216, %v213
  %v235 = vunpack.c.l.b16 %v219
  %v236 = vunpack.c.h.b16 %v219
  %v237 = vunpack.c.l.b16 %v220
  %v238 = vunpack.c.h.b16 %v220
  %v239 = vunpack.c.l.b16 %v221
  %v240 = vunpack.c.h.b16 %v221
  %v241 = vunpack.c.l.b16 %v222
  %v242 = vunpack.c.h.b16 %v222
  %v243 = vunpack.c.l.b16 %v223
  %v244 = vunpack.c.h.b16 %v223
  %v245 = vunpack.c.l.b16 %v224
  %v246 = vunpack.c.h.b16 %v224
  %v247 = vunpack.c.l.b16 %v225
  %v248 = vunpack.c.h.b16 %v225
  %v249 = vunpack.c.l.b16 %v226
  %v250 = vunpack.c.h.b16 %v226
  %v251 = vpack.c.b16 %v235, %v235
  %v252 = vpack.c.b16 %v236, %v236
  %v253 = vpack.c.b16 %v237, %v237
  %v254 = vpack.c.b16 %v238, %v238
  %v255 = vpack.c.b16 %v239, %v239
  %v256 = vpack.c.b16 %v240, %v240
  %v257 = vpack.c.b16 %v241, %v241
  %v258 = vpack.c.b16 %v242, %v242
  %v259 = vpack.c.b16 %v243, %v243
  %v260 = vpack.c.b16 %v244, %v244
  %v261 = vpack.c.b16 %v245, %v245
  %v262 = vpack.c.b16 %v246, %v246
  %v263 = vpack.c.b16 %v247, %v247
  %v264 = vpack.c.b16 %v248, %v248
  %v265 = vpack.c.b16 %v249, %v249
  %v266 = vpack.c.b16 %v250, %v250
  %vm283 = vcmask 519168
  %284 = vst.msk [vmem:[%s3] sm:$0xf] %vm283, %v251
  %285 = vst.msk [vmem:[%s3 + $0x4] sm:$0xf] %vm283, %v252
  %286 = vst.msk [vmem:[%s3 + $0x8] sm:$0xf] %vm283, %v253
  %287 = vst.msk [vmem:[%s3 + $0xc] sm:$0xf] %vm283, %v254
  %288 = vst.msk [vmem:[%s3 + $0x10] sm:$0xf] %vm283, %v255
  %289 = vst.msk [vmem:[%s3 + $0x14] sm:$0xf] %vm283, %v256
  %290 = vst.msk [vmem:[%s3 + $0x18] sm:$0xf] %vm283, %v257
  %291 = vst.msk [vmem:[%s3 + $0x1c] sm:$0xf] %vm283, %v258
  %292 = vst.msk [vmem:[%s3 + $0x20] sm:$0xf] %vm283, %v259
  %293 = vst.msk [vmem:[%s3 + $0x24] sm:$0xf] %vm283, %v260
  %294 = vst.msk [vmem:[%s3 + $0x28] sm:$0xf] %vm283, %v261
  %295 = vst.msk [vmem:[%s3 + $0x2c] sm:$0xf] %vm283, %v262
  %296 = vst.msk [vmem:[%s3 + $0x30] sm:$0xf] %vm283, %v263
  %297 = vst.msk [vmem:[%s3 + $0x34] sm:$0xf] %vm283, %v264
  %298 = vst.msk [vmem:[%s3 + $0x38] sm:$0xf] %vm283, %v265
  %299 = vst.msk [vmem:[%s3 + $0x3c] sm:$0xf] %vm283, %v266
  // Predicated region
  $region14: #{tpu_custom_call.1} parent=0 // pred_check
    _
  $region15: #{tpu_custom_call.1} parent=0 // pred_check_branch
    %301 = sbr.rel (0) target = $region17
  $region16: #{tpu_custom_call.1} parent=0 // pred_region
    _
  $region17: #{tpu_custom_call.1} parent=0 // pred_fallthru
    _
  // Predicated region
  $region18: #{tpu_custom_call.1} parent=0 // pred_check
    _
  $region19: #{tpu_custom_call.1} parent=0 // pred_check_branch
    %303 = sbr.rel (0) target = $region21
  $region20: #{tpu_custom_call.1} parent=0 // pred_region
    _
  $region21: #{tpu_custom_call.1} parent=0 // pred_fallthru
    _

</llo_original>
